<compile_context>
chip_gen: v7x
topology: tpu7x:2x2x1
jax: 0.10.0
libtpu: 0.0.40
codegen_flags: <defaults>
</compile_context>

<pallas_src>
import functools
import math

import jax
import jax.numpy as jnp
from jax import lax
from jax.experimental import pallas as pl
from jax.experimental.pallas import tpu as pltpu


def _round_up(v, mult):
    return ((v + mult - 1) // mult) * mult


def _tpu_vmem_capacity_bytes():
    try:
        return int(pltpu.get_tpu_info().vmem_capacity_bytes)
    except Exception:
        return 64 * 1024 * 1024  # conservative (v7x-sized) fallback


_RELAYOUT_MAX_ELEMS = 256 * 1024  # bounds the static relayout-copy unroll


def _choose_tb(batch, n_p, m_p, isz):
    """Batch-tile size (matrices per grid step), generation aware."""
    vmem_cap = _tpu_vmem_capacity_bytes()
    # Bytes the pipeline may occupy: double-buffered x/out blocks plus the
    # per-step y scratches.  ~24 MiB on 128-MiB-VMEM chips (v5e/v6e),
    # ~12 MiB on 64-MiB-VMEM v7x.
    budget = 24 * 2**20 if vmem_cap >= 100 * 2**20 else 12 * 2**20
    per_b = (2 * n_p * n_p * isz          # x block, double buffered
             + 2 * m_p * m_p * isz        # out block, double buffered
             + 2 * n_p * m_p * isz)       # y + relayouted-y scratch
    tb = max(1, budget // per_b)
    tb = min(tb, 64)                                           # sanity cap
    tb = min(tb, max(1, _RELAYOUT_MAX_ELEMS // (n_p * m_p)))   # unroll cap
    tb = min(tb, max(1, (batch + 1) // 2))   # keep grid >= 2 steps (v7x cores)
    # Make the output-slab lane width a multiple of 128 so the single block
    # store is unmasked lane-dense (only once tb is large enough to allow it).
    q = 128 // math.gcd(m_p, 128)
    if tb >= q:
        tb = (tb // q) * q
    return max(1, int(tb))


def _bimap_kernel(w_ref, x_ref, o_ref, y_ref, yt_ref, *, tb, n_p, m_p):
    # w_ref : (m_p, n_p)       resident weight (single-buffered)
    # x_ref : (tb*n_p, n_p)    tb input matrices stacked along sublanes
    # o_ref : (m_p, tb*m_p)    tb outputs stacked along lanes (lane-dense)
    # y_ref : (tb*n_p, m_p)    scratch: fused stage-1 result
    # yt_ref: (n_p, tb*m_p)    scratch: stage-1 result relayouted for stage 2
    w = w_ref[...]

    # Stage 1, fused over the TB block:  y[b*n_p+i, l] = sum_j x_b[i,j]*W[l,j]
    y_ref[...] = lax.dot_general(
        x_ref[...], w, (((1,), (1,)), ((), ())),
        preferred_element_type=jnp.float32).astype(y_ref.dtype)

    # Relayout (tb*n_p, m_p) -> (n_p, tb*m_p): static, per-matrix VMEM copies
    # (sublane-aligned reads, statically-offset lane windows).  This is the
    # one unavoidable relayout of the two-sided transform and is small VMEM
    # traffic next to the two matmuls; it overlaps with the DMA pipeline.
    for b in range(tb):
        yt_ref[:, b * m_p:(b + 1) * m_p] = y_ref[b * n_p:(b + 1) * n_p, :]

    # Stage 2, fused:  out[k, b*m_p+l] = sum_i W[k,i]*y_b[i,l].  MXU N dim is
    # tb*m_p and the result is written with ONE full-block store.
    o_ref[...] = jnp.dot(
        w, yt_ref[...], preferred_element_type=jnp.float32).astype(o_ref.dtype)


def bimap_pallas(x, weight):
    """Bilinear mapping W @ x @ W^T over arbitrary leading batch dims.

    Args:
        x: (..., n, n) array.
        weight: (m, n) array.
    Returns:
        (..., m, m) array in the promoted dtype of (x, weight).
    """
    m, n = weight.shape
    if x.ndim < 2 or x.shape[-1] != n or x.shape[-2] != n:
        raise ValueError("x must have shape (..., n, n) matching weight (m, n)")
    lead = x.shape[:-2]

    # One compute dtype end to end (avoids silent mixed-precision MXU paths).
    cdtype = jnp.result_type(x.dtype, weight.dtype)
    xb = x.reshape((-1, n, n)).astype(cdtype)
    w = weight.astype(cdtype)
    B = xb.shape[0]
    if B == 0:
        return jnp.zeros(lead + (m, m), dtype=cdtype)

    # Pad spatial dims to sublane multiples; zero padding is exact here.
    n_p = _round_up(n, 8)
    m_p = _round_up(m, 8)
    isz = jnp.dtype(cdtype).itemsize

    tb = _choose_tb(B, n_p, m_p, isz)
    b_pad = _round_up(B, tb)
    g = b_pad // tb

    x_pad = jnp.pad(xb, ((0, b_pad - B), (0, n_p - n), (0, n_p - n)))
    w_pad = jnp.pad(w, ((0, m_p - m), (0, n_p - n)))
    x2d = x_pad.reshape(b_pad * n_p, n_p)       # contiguous -> free reshape

    # VMEM budget: double-buffered x/out blocks + resident W + scratches.
    x_blk = tb * n_p * n_p * isz
    o_blk = m_p * tb * m_p * isz
    w_bytes = m_p * n_p * isz
    scr = 2 * tb * n_p * m_p * isz
    need = 2 * x_blk + 2 * o_blk + w_bytes + scr + 8 * 2**20
    cap = 64 * 2**20 if _tpu_vmem_capacity_bytes() >= 100 * 2**20 else 48 * 2**20
    vmem_limit = int(max(32 * 2**20, min(cap, need)))
    if need > cap:  # fail-safe; the budgets above keep us well under the cap
        vmem_limit = int(need)

    kernel = functools.partial(_bimap_kernel, tb=tb, n_p=n_p, m_p=m_p)
    out2d = pl.pallas_call(
        kernel,
        out_shape=jax.ShapeDtypeStruct((g * m_p, tb * m_p), cdtype),
        grid_spec=pltpu.PrefetchScalarGridSpec(
            num_scalar_prefetch=0,
            grid=(g,),
            in_specs=[
                # W: constant block index -> resident, single-buffered.
                pl.BlockSpec((m_p, n_p), lambda i: (0, 0),
                             pipeline_mode=pl.Buffered(1)),
                # TB stacked input matrices per step.
                pl.BlockSpec((tb * n_p, n_p), lambda i: (i, 0)),
            ],
            out_specs=pl.BlockSpec((m_p, tb * m_p), lambda i: (i, 0)),
            scratch_shapes=[
                pltpu.VMEM((tb * n_p, m_p), cdtype),   # y
                pltpu.VMEM((n_p, tb * m_p), cdtype),   # relayouted y
            ]),
        compiler_params=pltpu.CompilerParams(
            dimension_semantics=("parallel",),   # batch tiles shard across TCs on v7x
            vmem_limit_bytes=vmem_limit),
    )(w_pad, x2d)

    # Lane-stacked slab (g*m_p, tb*m_p) -> (B, m, m).
    out = out2d.reshape(g, m_p, tb, m_p).transpose(0, 2, 1, 3)
    out = out.reshape(b_pad, m_p, m_p)[:B, :m, :m]
    return out.reshape(lead + (m, m))


def make_orthogonal_weight(key, out_spatial, in_spatial, dtype=jnp.float32):
    """Deterministic (semi-)orthogonal weight (out_spatial, in_spatial) with
    orthonormal rows (matches torch init.orthogonal_ + orthogonal
    parametrization semantics for out_spatial <= in_spatial)."""
    a = jax.random.normal(key, (in_spatial, out_spatial), dtype=jnp.float32)
    q, _ = jnp.linalg.qr(a)              # (in_spatial, out_spatial), ortho cols
    return q.T.astype(dtype)             # (out_spatial, in_spatial), ortho rows


if __name__ == "__main__":
    key = jax.random.PRNGKey(0)
    k_w, k_x, k_w2, k_x2 = jax.random.split(key, 4)

    # --- Case 1: aligned sizes, simple batch ---------------------------------
    batch, n_in, n_out = 2, 16, 8
    a = jax.random.normal(k_x, (batch, n_in, n_in), dtype=jnp.float32)
    x = jnp.einsum("bij,bkj->bik", a, a) + 1e-3 * jnp.eye(n_in)[None]
    w = make_orthogonal_weight(k_w, n_out, n_in)

    out = jax.block_until_ready(bimap_pallas(x, w))
    ref = jnp.einsum("ki,bij,lj->bkl", w, x, w,
                     precision=lax.Precision.HIGHEST)
    assert out.shape == (batch, n_out, n_out)
    err = jnp.max(jnp.abs(out - ref))
    tol = 1e-3 * (1.0 + jnp.max(jnp.abs(ref)))
    assert err < tol, f"case1 mismatch vs reference: {err} (tol {tol})"

    # --- Case 2: unaligned spatial dims + extra leading batch dims -----------
    b0, b1, n_in2, n_out2 = 2, 3, 13, 5
    a2 = jax.random.normal(k_x2, (b0, b1, n_in2, n_in2), dtype=jnp.float32)
    x2 = jnp.einsum("cbij,cbkj->cbik", a2, a2) + 1e-3 * jnp.eye(n_in2)[None, None]
    w2 = make_orthogonal_weight(k_w2, n_out2, n_in2)

    out2 = jax.block_until_ready(bimap_pallas(x2, w2))
    ref2 = jnp.einsum("ki,cbij,lj->cbkl", w2, x2, w2,
                      precision=lax.Precision.HIGHEST)
    assert out2.shape == (b0, b1, n_out2, n_out2)
    err2 = jnp.max(jnp.abs(out2 - ref2))
    tol2 = 1e-3 * (1.0 + jnp.max(jnp.abs(ref2)))
    assert err2 < tol2, f"case2 mismatch vs reference: {err2} (tol {tol2})"

    print("KERNEL_OK")
</pallas_src>

<mosaic_0001>
module attributes {stable_mosaic.version = 11 : i64} {
  func.func @_bimap_kernel(%arg0: i32, %arg1: memref<8x16xf32, #tpu.memory_space<vmem>>, %arg2: memref<16x16xf32, #tpu.memory_space<vmem>>, %arg3: memref<8x8xf32, #tpu.memory_space<vmem>>, %arg4: memref<16x8xf32, #tpu.memory_space<vmem>>, %arg5: memref<16x8xf32, #tpu.memory_space<vmem>>) attributes {dimension_semantics = [#tpu.dimension_semantics<parallel>], iteration_bounds = array<i64: 2>, scalar_prefetch = 0 : i64, scratch_operands = 2 : i64, tpu.core_type = #tpu.core_type<tc>, window_params = [{pipeline_mode = #tpu.pipeline_mode<synchronous>, transform_indices = @transform_0, window_bounds = array<i64: 8, 16>}, {transform_indices = @transform_1, window_bounds = array<i64: 16, 16>}, {transform_indices = @transform_2, window_bounds = array<i64: 8, 8>}]} {
    %c0 = arith.constant 0 : index
    %c0_0 = arith.constant 0 : index
    %0 = vector.load %arg1[%c0, %c0_0] : memref<8x16xf32, #tpu.memory_space<vmem>>, vector<8x16xf32>
    %c0_1 = arith.constant 0 : index
    %c0_2 = arith.constant 0 : index
    %1 = vector.load %arg2[%c0_1, %c0_2] : memref<16x16xf32, #tpu.memory_space<vmem>>, vector<16x16xf32>
    %cst = arith.constant dense<0.000000e+00> : vector<16x8xf32>
    %2 = tpu.matmul %1, %0, %cst {dimension_numbers = #tpu.dot_dimension_numbers<[1], [1], [0], [0], [0, 0, 1, 0], [], []>} : vector<16x16xf32>, vector<8x16xf32>, vector<16x8xf32> -> vector<16x8xf32>
    %c0_3 = arith.constant 0 : index
    %c0_4 = arith.constant 0 : index
    %3 = vector.load %arg4[%c0_3, %c0_4] : memref<16x8xf32, #tpu.memory_space<vmem>>, vector<16x8xf32>
    tpu.vector_store %arg4[%c0_3, %c0_4], %2 {strides = array<i32>} : memref<16x8xf32, #tpu.memory_space<vmem>>, vector<16x8xf32>,
    %c0_5 = arith.constant 0 : index
    %c0_6 = arith.constant 0 : index
    %4 = vector.load %arg4[%c0_5, %c0_6] : memref<16x8xf32, #tpu.memory_space<vmem>>, vector<16x8xf32>
    %c0_7 = arith.constant 0 : index
    %c0_8 = arith.constant 0 : index
    %5 = vector.load %arg5[%c0_7, %c0_8] : memref<16x8xf32, #tpu.memory_space<vmem>>, vector<16x8xf32>
    tpu.vector_store %arg5[%c0_7, %c0_8], %4 {strides = array<i32>} : memref<16x8xf32, #tpu.memory_space<vmem>>, vector<16x8xf32>,
    %c0_9 = arith.constant 0 : index
    %c0_10 = arith.constant 0 : index
    %6 = vector.load %arg5[%c0_9, %c0_10] : memref<16x8xf32, #tpu.memory_space<vmem>>, vector<16x8xf32>
    %cst_11 = arith.constant dense<0.000000e+00> : vector<8x8xf32>
    %7 = tpu.matmul %0, %6, %cst_11 {dimension_numbers = #tpu.dot_dimension_numbers<[1], [0], [0], [1], [0, 0, 1, 1], [], []>} : vector<8x16xf32>, vector<16x8xf32>, vector<8x8xf32> -> vector<8x8xf32>
    %c0_12 = arith.constant 0 : index
    %c0_13 = arith.constant 0 : index
    %8 = vector.load %arg3[%c0_12, %c0_13] : memref<8x8xf32, #tpu.memory_space<vmem>>, vector<8x8xf32>
    tpu.vector_store %arg3[%c0_12, %c0_13], %7 {strides = array<i32>} : memref<8x8xf32, #tpu.memory_space<vmem>>, vector<8x8xf32>,
    return
  }
  func.func @transform_0(%arg0: i32) -> (i32, i32) {
    %c0_i32 = arith.constant 0 : i32
    %c0_i32_0 = arith.constant 0 : i32
    %c0_i32_1 = arith.constant 0 : i32
    return %c0_i32, %c0_i32_0 : i32, i32
  }
  func.func @transform_1(%arg0: i32) -> (i32, i32) {
    %c0_i32 = arith.constant 0 : i32
    %c0_i32_0 = arith.constant 0 : i32
    return %arg0, %c0_i32 : i32, i32
  }
  func.func @transform_2(%arg0: i32) -> (i32, i32) {
    %c0_i32 = arith.constant 0 : i32
    %c0_i32_0 = arith.constant 0 : i32
    return %arg0, %c0_i32 : i32, i32
  }
}

</mosaic_0001>

<llo_original>
// kernel: tpu_custom_call.1
$region0: #{tpu_custom_call.1}
  #allocation0 [shape = 'u32[]', space=smem, size = 0x4, offset = 0x4, fixed_abs, tag = 'smem constant byte address 0x4 - core index']
  #allocation1 [shape = 'u32[144,128]{1,0:T(1,128)}', space=vmem, size = 0x12000, scoped, tag = 'internal scratch']
  #allocation2 [shape = 'f32[16,8]{1,0:T(8,128)}', space=vmem, size = 0x2000, scoped, tag = 'scratch operand']
  #allocation3 [shape = 'f32[16,8]{1,0:T(8,128)}', space=vmem, size = 0x2000, scoped, tag = 'scratch operand']
  %s0 = inlined_call_operand.vmem [shape: f32[8,16], index: 0, kind: input, shape index: {}]
  %s1 = inlined_call_operand.vmem [shape: f32[32,16], index: 1, kind: input, shape index: {}]
  %s2 = inlined_call_operand.vmem [shape: f32[16,8], index: 2, kind: output, shape index: {}]
  %s3 = sld [smem:[#allocation0]]
  $region41: #{tpu_custom_call.1} parent=0
    _
  %s5 = ssub.s32 1, %s3
  %s6 = scalar_select 0, %s5, %s3
  loop: start=0, step=1, limit=4
  $region2: #{tpu_custom_call.1} parent=0 // loop_pre_header
    _
  $region3: #{tpu_custom_call.1} parent=0 // loop_header
    %s8 = sphi 0, %s12
    %p9 = scmp.ge.s32.totalorder %s8, 4
    %s16 = sphi 0, %s16
    %s18 = sphi 0, %s16
    %s19 = sphi 0, %s18
    %s33 = sphi 0, %s19
    %s39 = sphi 0, %s41
    %s42 = sphi 0, %s39
    %s43 = sphi 0, %s42
    %s59 = sphi 0, %s43
    %s65 = sphi 0, %s67
    %s68 = sphi 0, %s65
    %s69 = sphi 0, %s68
    %s85 = sphi 0, %s69
  $region4: #{tpu_custom_call.1} parent=0 // loop_header_branch
    %11 = sbr.rel (%p9) target = $region8
  $region5: #{tpu_custom_call.1} parent=0 // loop_body
    %s13 = ssub.s32 %s8, 1
    %s14 = ssub.s32 %s8, 2
    %s15 = sadd.s32 %s8, 1
    %s17 = sadd.s32 %s16, 1
    %p20 = scmp.eq.s32.totalorder %s8, 1
    %p21 = scmp.ne.s32.totalorder %s16, %s18
    %p22 = scmp.eq.s32.totalorder %s8, 0
    %p23 = por %p21, %p22
    %p24 = scmp.ne.s32.totalorder %s16, %s18
    %p25 = scmp.eq.s32.totalorder %s13, 1
    %p26 = por %p24, %p25
    %p27 = scmp.ne.s32.totalorder %s18, %s19
    %p28 = scmp.eq.s32.totalorder %s13, 0
    %p29 = por %p27, %p28
    %p30 = scmp.ne.s32.totalorder %s18, %s19
    %p31 = scmp.eq.s32.totalorder %s14, 1
    %p32 = por %p30, %p31
    %p34 = scmp.ne.s32.totalorder %s19, %s33
    %p35 = scmp.eq.s32.totalorder %s14, 0
    %p36 = por %p34, %p35
    %s37 = ssub.s32 %s8, %s15
    %p38 = scmp.eq.s32.totalorder %s37, 0
    %s40 = sadd.s32 %s39, 1
    %s41 = scalar_select %p38, %s39, %s40
    %p44 = pneg %p38
    %p45 = scmp.eq.s32.totalorder %s8, 1
    %p46 = por %p44, %p45
    %p47 = scmp.ne.s32.totalorder %s39, %s42
    %p48 = scmp.eq.s32.totalorder %s8, 0
    %p49 = por %p47, %p48
    %p50 = scmp.ne.s32.totalorder %s39, %s42
    %p51 = scmp.eq.s32.totalorder %s13, 1
    %p52 = por %p50, %p51
    %p53 = scmp.ne.s32.totalorder %s42, %s43
    %p54 = scmp.eq.s32.totalorder %s13, 0
    %p55 = por %p53, %p54
    %p56 = scmp.ne.s32.totalorder %s42, %s43
    %p57 = scmp.eq.s32.totalorder %s14, 1
    %p58 = por %p56, %p57
    %p60 = scmp.ne.s32.totalorder %s43, %s59
    %p61 = scmp.eq.s32.totalorder %s14, 0
    %p62 = por %p60, %p61
    %s63 = ssub.s32 %s8, %s15
    %p64 = scmp.eq.s32.totalorder %s63, 0
    %s66 = sadd.s32 %s65, 1
    %s67 = scalar_select %p64, %s65, %s66
    %p70 = pneg %p64
    %p71 = scmp.eq.s32.totalorder %s8, 1
    %p72 = por %p70, %p71
    %p73 = scmp.ne.s32.totalorder %s65, %s68
    %p74 = scmp.eq.s32.totalorder %s8, 0
    %p75 = por %p73, %p74
    %p76 = scmp.ne.s32.totalorder %s65, %s68
    %p77 = scmp.eq.s32.totalorder %s13, 1
    %p78 = por %p76, %p77
    %p79 = scmp.ne.s32.totalorder %s68, %s69
    %p80 = scmp.eq.s32.totalorder %s13, 0
    %p81 = por %p79, %p80
    %p82 = scmp.ne.s32.totalorder %s68, %s69
    %p83 = scmp.eq.s32.totalorder %s14, 1
    %p84 = por %p82, %p83
    %p86 = scmp.ne.s32.totalorder %s69, %s85
    %p87 = scmp.eq.s32.totalorder %s14, 0
    %p88 = por %p86, %p87
    %p89 = scmp.le.s32.totalorder 1, %s8
    %p90 = scmp.lt.s32.totalorder %s8, 3
    %p91 = pnand %p89, %p90
    %p92 = pneg %p91
    // Predicated region
    $region9: #{tpu_custom_call.1} parent=5 // pred_check
      _
    $region10: #{tpu_custom_call.1} parent=5 // pred_check_branch
      %94 = sbr.rel (%p91) target = $region12
    $region11: #{tpu_custom_call.1} parent=5 // pred_region
      %s95 = ssub.s32 %s8, 1
      // Predicated region
      $region13: #{tpu_custom_call.1} parent=11 // pred_check
        %p96 = pneg %p29
      $region14: #{tpu_custom_call.1} parent=11 // pred_check_branch
        %98 = sbr.rel (%p96) target = $region16
      $region15: #{tpu_custom_call.1} parent=11 // pred_region
        _
      $region16: #{tpu_custom_call.1} parent=11 // pred_fallthru
        _
    $region12: #{tpu_custom_call.1} parent=5 // pred_fallthru
      _
    %p99 = scmp.lt.s32.totalorder %s8, 2
    // Predicated region
    $region17: #{tpu_custom_call.1} parent=5 // pred_check
      %p100 = pneg %p99
    $region18: #{tpu_custom_call.1} parent=5 // pred_check_branch
      %102 = sbr.rel (%p100) target = $region20
    $region19: #{tpu_custom_call.1} parent=5 // pred_region
      // Predicated region
      $region21: #{tpu_custom_call.1} parent=19 // pred_check
        %p103 = pneg %p49
      $region22: #{tpu_custom_call.1} parent=19 // pred_check_branch
        %105 = sbr.rel (%p103) target = $region24
      $region23: #{tpu_custom_call.1} parent=19 // pred_region
        %s106 = smul.u32 2, %s8
        %p107 = scmp.lt.s32.totalorder %s106, 3
        %s108 = scalar_select %p107, %s106, 3
        %s109 = smul.addr %s108, 8
        %s110 = scalar_lea.vmem %s1, %s109
        %s111 = smul.u32 2, %s8
      $region24: #{tpu_custom_call.1} parent=19 // pred_fallthru
        _
    $region20: #{tpu_custom_call.1} parent=5 // pred_fallthru
      _
    %p112 = scmp.le.s32.totalorder 1, %s8
    %p113 = scmp.lt.s32.totalorder %s8, 3
    %p114 = pnand %p112, %p113
    %p115 = pneg %p114
    // Predicated region
    $region25: #{tpu_custom_call.1} parent=5 // pred_check
      _
    $region26: #{tpu_custom_call.1} parent=5 // pred_check_branch
      %117 = sbr.rel (%p114) target = $region28
    $region27: #{tpu_custom_call.1} parent=5 // pred_region
      %s118 = ssub.s32 %s8, 1
      %p119 = pneg %p29
      %p120 = pneg %p26
      %s121 = smul.u32 2, %s13
      %p122 = scmp.lt.s32.totalorder %s121, 3
      %s123 = scalar_select %p122, %s121, 3
      %s124 = smul.addr %s123, 8
      %s125 = scalar_lea.vmem %s1, %s124
      %p126 = pneg %p55
      %p127 = pneg %p52
      %p128 = pneg %p81
      %p129 = pneg %p78
      %p130 = scmp.lt.s32.totalorder %s13, 1
      %s131 = scalar_select %p130, %s13, 1
      %s132 = smul.addr %s131, 8
      %s133 = scalar_lea.vmem %s2, %s132
      %s134 = smul.u32 2, %s13
      %p135 = scmp.lt.s32.totalorder %s134, 3
      %s136 = scalar_select %p135, %s134, 3
      %s137 = smul.addr %s136, 8
      %s138 = scalar_lea.vmem %s1, %s137
      %s139 = smul.u32 2, %s13
      %p140 = scmp.lt.s32.totalorder %s13, 1
      %s141 = scalar_select %p140, %s13, 1
      %s142 = smul.addr %s141, 8
      %s143 = scalar_lea.vmem %s2, %s142
      %v144 = vld [vmem:[%s0] sm:$0xff]
      %v145 = vld [vmem:[%s138] sm:$0xff]
      %v146 = vld [vmem:[%s138 + $0x8] sm:$0xff]
      %vm147 = vcmask 130048
      %v149 = vsel %vm147, %v145, 0
      %v152 = vsel %vm147, %v146, 0
      %v155 = vsel %vm147, %v144, 0
      %157 = vmatprep.subr.mxu0 0.0
      %158 = vmatpush1.xpose.msra.mxu0 %v155
      %159 = vmatprep.subr.mxu0 0.0
      %160 = vmatpush1.xpose.msra.mxu0 0.0
      %161 = vmatprep.subr.mxu0 0.0
      %162 = vmatpush1.xpose.msra.mxu0 0.0
      %163 = vmatprep.subr.mxu0 0.0
      %164 = vmatpush1.xpose.msra.mxu0 0.0
      %165 = vmatprep.subr.mxu0 0.0
      %166 = vmatpush1.xpose.msra.mxu0 0.0
      %167 = vmatprep.subr.mxu0 0.0
      %168 = vmatpush1.xpose.msra.mxu0 0.0
      %169 = vmatprep.subr.mxu0 0.0
      %170 = vmatpush1.xpose.msra.mxu0 0.0
      %171 = vmatprep.subr.mxu0 0.0
      %172 = vmatpush1.xpose.msra.mxu0 0.0
      %173 = vmatprep.subr.mxu0 0.0
      %174 = vmatpush1.xpose.msra.mxu0 0.0
      %175 = vmatprep.subr.mxu0 0.0
      %176 = vmatpush1.xpose.msra.mxu0 0.0
      %177 = vmatprep.subr.mxu0 0.0
      %178 = vmatpush1.xpose.msra.mxu0 0.0
      %179 = vmatprep.subr.mxu0 0.0
      %180 = vmatpush1.xpose.msra.mxu0 0.0
      %181 = vmatprep.subr.mxu0 0.0
      %182 = vmatpush1.xpose.msra.mxu0 0.0
      %183 = vmatprep.subr.mxu0 0.0
      %184 = vmatpush1.xpose.msra.mxu0 0.0
      %185 = vmatprep.subr.mxu0 0.0
      %186 = vmatpush1.xpose.msra.mxu0 0.0
      %187 = vmatprep.subr.mxu0 0.0
      %188 = vmatpush1.xpose.msra.mxu0 0.0
      %189 = vmatprep.subr.mxu0 0.0
      %190 = vmatpush1.xpose.msra.mxu0 0.0
      %191 = vmatprep.subr.mxu0 0.0
      %192 = vmatpush1.xpose.msra.mxu0 0.0
      %193 = vmatprep.subr.mxu0 0.0
      %194 = vmatpush1.xpose.msra.mxu0 0.0
      %195 = vmatprep.subr.mxu0 0.0
      %196 = vmatpush1.xpose.msra.mxu0 0.0
      %197 = vmatprep.subr.mxu0 0.0
      %198 = vmatpush1.xpose.msra.mxu0 0.0
      %199 = vmatprep.subr.mxu0 0.0
      %200 = vmatpush1.xpose.msra.mxu0 0.0
      %201 = vmatprep.subr.mxu0 0.0
      %202 = vmatpush1.xpose.msra.mxu0 0.0
      %203 = vmatprep.subr.mxu0 0.0
      %204 = vmatpush1.xpose.msra.mxu0 0.0
      %205 = vmatprep.subr.mxu0 0.0
      %206 = vmatpush1.xpose.msra.mxu0 0.0
      %207 = vmatprep.subr.mxu0 0.0
      %208 = vmatpush1.xpose.msra.mxu0 0.0
      %209 = vmatprep.subr.mxu0 0.0
      %210 = vmatpush1.xpose.msra.mxu0 0.0
      %211 = vmatprep.subr.mxu0 0.0
      %212 = vmatpush1.xpose.msra.mxu0 0.0
      %213 = vmatprep.subr.mxu0 0.0
      %214 = vmatpush1.xpose.msra.mxu0 0.0
      %215 = vmatprep.subr.mxu0 0.0
      %216 = vmatpush1.xpose.msra.mxu0 0.0
      %217 = vmatprep.subr.mxu0 0.0
      %218 = vmatpush1.xpose.msra.mxu0 0.0
      %219 = vmatprep.subr.mxu0 0.0
      %220 = vmatpush1.xpose.msra.mxu0 0.0
      %221 = vmatprep.mubr.f32.mxu0 0.0
      %222 = vmatmul.mubr.f32.gmra.mrb[0].mxu0 %v149
      %v223 = vpop.f32.mrb[0].mxu0
      %v224 = vadd.f32 0.0, %v223
      %v225 = vpop.f32.mrb[0].mxu0
      %226 = vmatprep.mubr.f32.mxu0 0.0
      %227 = vmatmul.mubr.f32.gmra.mrb[0].mxu0 %v152
      %v228 = vpop.f32.mrb[0].mxu0
      %v229 = vadd.f32 0.0, %v228
      %v230 = vpop.f32.mrb[0].mxu0
      %231 = vdwg.mxu0
      %vm232 = vcmask 64512
      %233 = vst.msk [vmem:[#allocation2] sm:$0xff] %vm232, %v224
      %234 = vst.msk [vmem:[#allocation2 + $0x8] sm:$0xff] %vm232, %v229
      %v235 = vld [vmem:[#allocation2] sm:$0xff]
      %v236 = vld [vmem:[#allocation2 + $0x8] sm:$0xff]
      %237 = vst.msk [vmem:[#allocation3] sm:$0xff] %vm232, %v235
      %238 = vst.msk [vmem:[#allocation3 + $0x8] sm:$0xff] %vm232, %v236
      %v239 = vld [vmem:[#allocation3] sm:$0xff]
      %v240 = vld [vmem:[#allocation3 + $0x8] sm:$0xff]
      %241 = vmatprep.subr.mxu0 0.0
      %242 = vmatpush1.msra.mxu0 %v239
      %243 = vmatprep.subr.mxu0 0.0
      %244 = vmatpush1.msra.mxu0 %v240
      %245 = vmatprep.subr.mxu0 0.0
      %246 = vmatpush1.msra.mxu0 0.0
      %247 = vmatprep.subr.mxu0 0.0
      %248 = vmatpush1.msra.mxu0 0.0
      %249 = vmatprep.subr.mxu0 0.0
      %250 = vmatpush1.msra.mxu0 0.0
      %251 = vmatprep.subr.mxu0 0.0
      %252 = vmatpush1.msra.mxu0 0.0
      %253 = vmatprep.subr.mxu0 0.0
      %254 = vmatpush1.msra.mxu0 0.0
      %255 = vmatprep.subr.mxu0 0.0
      %256 = vmatpush1.msra.mxu0 0.0
      %257 = vmatprep.subr.mxu0 0.0
      %258 = vmatpush1.msra.mxu0 0.0
      %259 = vmatprep.subr.mxu0 0.0
      %260 = vmatpush1.msra.mxu0 0.0
      %261 = vmatprep.subr.mxu0 0.0
      %262 = vmatpush1.msra.mxu0 0.0
      %263 = vmatprep.subr.mxu0 0.0
      %264 = vmatpush1.msra.mxu0 0.0
      %265 = vmatprep.subr.mxu0 0.0
      %266 = vmatpush1.msra.mxu0 0.0
      %267 = vmatprep.subr.mxu0 0.0
      %268 = vmatpush1.msra.mxu0 0.0
      %269 = vmatprep.subr.mxu0 0.0
      %270 = vmatpush1.msra.mxu0 0.0
      %271 = vmatprep.subr.mxu0 0.0
      %272 = vmatpush1.msra.mxu0 0.0
      %273 = vmatprep.subr.mxu0 0.0
      %274 = vmatpush1.msra.mxu0 0.0
      %275 = vmatprep.subr.mxu0 0.0
      %276 = vmatpush1.msra.mxu0 0.0
      %277 = vmatprep.subr.mxu0 0.0
      %278 = vmatpush1.msra.mxu0 0.0
      %279 = vmatprep.subr.mxu0 0.0
      %280 = vmatpush1.msra.mxu0 0.0
      %281 = vmatprep.subr.mxu0 0.0
      %282 = vmatpush1.msra.mxu0 0.0
      %283 = vmatprep.subr.mxu0 0.0
      %284 = vmatpush1.msra.mxu0 0.0
      %285 = vmatprep.subr.mxu0 0.0
      %286 = vmatpush1.msra.mxu0 0.0
      %287 = vmatprep.subr.mxu0 0.0
      %288 = vmatpush1.msra.mxu0 0.0
      %289 = vmatprep.subr.mxu0 0.0
      %290 = vmatpush1.msra.mxu0 0.0
      %291 = vmatprep.subr.mxu0 0.0
      %292 = vmatpush1.msra.mxu0 0.0
      %293 = vmatprep.subr.mxu0 0.0
      %294 = vmatpush1.msra.mxu0 0.0
      %295 = vmatprep.subr.mxu0 0.0
      %296 = vmatpush1.msra.mxu0 0.0
      %297 = vmatprep.subr.mxu0 0.0
      %298 = vmatpush1.msra.mxu0 0.0
      %299 = vmatprep.subr.mxu0 0.0
      %300 = vmatpush1.msra.mxu0 0.0
      %301 = vmatprep.subr.mxu0 0.0
      %302 = vmatpush1.msra.mxu0 0.0
      %303 = vmatprep.subr.mxu0 0.0
      %304 = vmatpush1.msra.mxu0 0.0
      %305 = vmatprep.mubr.f32.mxu0 0.0
      %306 = vmatmul.mubr.f32.gmra.mrb[0].mxu0 %v155
      %v307 = vpop.f32.mrb[0].mxu0
      %v308 = vadd.f32 0.0, %v307
      %v309 = vpop.f32.mrb[0].mxu0
      %310 = vdwg.mxu0
      %311 = vst.msk [vmem:[%s143] sm:$0xff] %vm232, %v308
      %p312 = scmp.lt.s32.totalorder %s13, 1
      %s313 = scalar_select %p312, %s13, 1
      %s314 = smul.addr %s313, 8
      %s315 = scalar_lea.vmem %s2, %s314
      // Predicated region
      $region29: #{tpu_custom_call.1} parent=27 // pred_check
        %p316 = pneg %p78
      $region30: #{tpu_custom_call.1} parent=27 // pred_check_branch
        %318 = sbr.rel (%p316) target = $region32
      $region31: #{tpu_custom_call.1} parent=27 // pred_region
        _
      $region32: #{tpu_custom_call.1} parent=27 // pred_fallthru
        _
    $region28: #{tpu_custom_call.1} parent=5 // pred_fallthru
      _
    %p319 = scmp.le.s32.totalorder 2, %s8
    // Predicated region
    $region33: #{tpu_custom_call.1} parent=5 // pred_check
      %p320 = pneg %p319
    $region34: #{tpu_custom_call.1} parent=5 // pred_check_branch
      %322 = sbr.rel (%p320) target = $region36
    $region35: #{tpu_custom_call.1} parent=5 // pred_region
      %s323 = ssub.s32 %s8, 2
      // Predicated region
      $region37: #{tpu_custom_call.1} parent=35 // pred_check
        %p324 = pneg %p84
      $region38: #{tpu_custom_call.1} parent=35 // pred_check_branch
        %326 = sbr.rel (%p324) target = $region40
      $region39: #{tpu_custom_call.1} parent=35 // pred_region
        %p327 = scmp.lt.s32.totalorder %s14, 1
        %s328 = scalar_select %p327, %s14, 1
        %s329 = smul.addr %s328, 8
        %s330 = scalar_lea.vmem %s2, %s329
      $region40: #{tpu_custom_call.1} parent=35 // pred_fallthru
        _
    $region36: #{tpu_custom_call.1} parent=5 // pred_fallthru
      _
  $region6: #{tpu_custom_call.1} parent=0 // loop_footer
    %s12 = sadd.s32 1, %s8
  $region7: #{tpu_custom_call.1} parent=0 // loop_footer_branch
    %7 = sbr.rel target = $region3
  $region8: #{tpu_custom_call.1} parent=0 // loop_exit
    _

</llo_original>
